<compile_context>
chip_gen: v5e
topology: v5e:2x2
jax: 0.10.0
libtpu: 0.0.40
codegen_flags: <defaults>
</compile_context>

<pallas_src>
import functools

import jax
import jax.numpy as jnp
from jax.experimental import pallas as pl
from jax.experimental.pallas import tpu as pltpu


def _round_up(x: int, m: int) -> int:
    return (x + m - 1) // m * m


def _vmem_capacity_bytes() -> int:
    try:
        return int(pltpu.get_tpu_info().vmem_capacity_bytes)
    except Exception:
        return 64 * 1024 * 1024  # conservative default: v7x per-TC VMEM


def precompute_effective_weights(w, connectivity=None, passage=None):
    """Config-time fold (done once, like register_buffer) of FilterSynapseSet's
    connectivity filter and `passage` block into the dendrite weights, plus ALL layout
    padding so the per-timestep hot path never copies W again:
      connectivity[i, j] == False -> terminal i never drives neuron j
      passage[i, j]      == True  -> entry carries no contribution (folded to zero)
    Returns (w_eff, n_post): bf16 weights with rows padded to a multiple of 8 and
    columns to a multiple of 128 (lane-dense output stores), plus the true N_POST so
    the kernel output can be un-padded.  Stored in bf16: halves HBM traffic; the
    kernel accumulates in f32 on the MXU (bf16 quantization of operands is part of
    this API's numerical contract).
    """
    w = jnp.asarray(w, jnp.float32)
    n_pre, n_post = w.shape
    gate = jnp.ones_like(w)
    if connectivity is not None:
        gate = gate * jnp.asarray(connectivity, jnp.float32)
    if passage is not None:
        gate = gate * (1.0 - jnp.asarray(passage, jnp.float32))
    w_eff = (w * gate).astype(jnp.bfloat16)
    n_pre_p, n_post_p = _round_up(n_pre, 8), _round_up(n_post, 128)
    if (n_pre_p, n_post_p) != (n_pre, n_post):
        w_eff = jnp.pad(w_eff, ((0, n_pre_p - n_pre), (0, n_post_p - n_post)))
    return w_eff, n_post


def _plan_tiles(b_p, mb, n_pre_p, n_post_p, budget):
    """Pick (resident, tk, tn) with honest VMEM accounting.

    footprint = double-buffered bf16 W tile + double-buffered f32 out block
              + either the fully resident e (f32) / mask (bf16) blocks + bf16 em scratch
                (resident path) or per-K-tile e/mask blocks (streamed path, large B*N_PRE).
    tn is a divisor of n_post_p (multiple of 128) -> zero call-time W padding; >=2 column
    tiles are preferred so the 'parallel' axis shards across TensorCores (v7x megacore).
    tk is the full reduction or a multiple-of-256 divisor (MXU depth, lane-aligned pl.ds).
    """
    def footprint(tk, tn, resident):
        w_bytes = 2 * tk * tn * 2
        out_bytes = 2 * b_p * tn * 4
        if resident:
            act = 2 * b_p * n_pre_p * 4 + 2 * mb * n_pre_p * 2 + b_p * n_pre_p * 2
        else:
            act = 2 * b_p * tk * 4 + 2 * mb * tk * 2
        return act + w_bytes + out_bytes

    tn_all = [d for d in range(n_post_p, 0, -128) if n_post_p % d == 0]
    tn_pref = [d for d in tn_all if 2 * d <= n_post_p] or tn_all
    tk_mults = [d for d in range((n_pre_p // 256) * 256, 0, -256) if d and n_pre_p % d == 0]
    tk_all = [n_pre_p] + [d for d in tk_mults if d != n_pre_p]

    act_res = 2 * b_p * n_pre_p * 4 + 2 * mb * n_pre_p * 2 + b_p * n_pre_p * 2
    modes = [True, False] if act_res <= budget // 2 else [False]

    for resident in modes:
        for tns in (tn_pref, tn_all):
            best = None
            for tn in tns:
                for tk in tk_all:  # descending: first fit is the largest tk for this tn
                    foot = footprint(tk, tn, resident)
                    if foot <= budget:
                        steps = (n_post_p // tn) * (n_pre_p // tk)
                        if best is None or steps < best[0]:
                            best = (steps, tk, tn, foot)
                        break
            if best is not None:
                _, tk, tn, foot = best
                return resident, tk, tn, foot

    # Pathological fallback (gigantic shapes / tiny budgets): smallest tiles, streamed
    # activations; may exceed the requested budget but still bounded by physical VMEM
    # for any sane SNN shape.
    tk, tn = tk_all[-1], tn_all[-1]
    return False, tk, tn, footprint(tk, tn, False)


def _synapse_kernel(e_ref, mask_ref, w_ref, out_ref, *scratch, tk, resident):
    # grid = (N_POST column tiles [parallel], N_PRE reduction tiles [arbitrary, last])
    k = pl.program_id(1)

    @pl.when(k == 0)
    def _init():
        out_ref[...] = jnp.zeros_like(out_ref)

    if resident:
        em_ref = scratch[0]

        @pl.when(k == 0)
        def _mask_once():
            # e *= mask once per column tile (VPU), stored bf16: halves per-step vld
            # bytes and removes the redundant multiply from every (j, k) iteration.
            em_ref[...] = (e_ref[...] * mask_ref[...].astype(jnp.float32)
                           ).astype(jnp.bfloat16)

        off = pl.multiple_of(k * tk, tk)
        em = em_ref[:, pl.ds(off, tk)]
    else:
        # Streamed activations (large B*N_PRE residency, e.g. v7x 64 MiB VMEM).
        em = (e_ref[...] * mask_ref[...].astype(jnp.float32)).astype(jnp.bfloat16)

    # Dendrite integration on the MXU, accumulating directly into the resident f32
    # output block (grid-invariant out BlockSpec across the reduction axis).
    out_ref[...] += jnp.dot(em, w_ref[...], preferred_element_type=jnp.float32)


def filter_synapse_forward(e, mask, w_eff, n_post=None, *, vmem_budget_bytes=None):
    """Masked, connectivity-filtered synaptic projection  I = (e * mask) @ w_eff.

    e:     (N_PRE,) or (B, N_PRE) neurotransmitter release (B = batched masks/timesteps).
    mask:  broadcastable gating: scalar, (N_PRE,), (1, N_PRE) or (B, N_PRE); bool or float.
    w_eff: (N_PRE_pad, N_POST_pad) effective weights from precompute_effective_weights.
    n_post: true number of post-synaptic neurons (defaults to w_eff.shape[1]).
    returns (N_POST,) or (B, N_POST) dendritic input current, f32.
    """
    w_eff = jnp.asarray(w_eff, jnp.bfloat16)
    n_pre_p, n_post_p = w_eff.shape
    if n_post is None:
        n_post = n_post_p
    assert n_post_p % 128 == 0 and n_post <= n_post_p, (
        "w_eff columns must be padded to a multiple of 128 at config time; "
        "use precompute_effective_weights().")

    e = jnp.asarray(e, jnp.float32)
    batched = e.ndim == 2
    e2 = e if batched else e[None, :]
    b, n_pre = e2.shape
    assert n_pre <= n_pre_p <= _round_up(n_pre, 8), (
        "axon terminal count must match (config-padded) weight rows")

    # mask -> bf16, never materialized as a (B, N_PRE) f32 array; scalar / per-terminal
    # masks stay as a single (1, N_PRE) row and broadcast inside the kernel.
    m = jnp.asarray(mask)
    if m.ndim == 0:
        m2 = jnp.broadcast_to(m.astype(jnp.bfloat16), (1, n_pre))
    elif m.ndim == 1:
        m2 = m.astype(jnp.bfloat16).reshape(1, n_pre)
    elif m.shape == (1, n_pre):
        m2 = m.astype(jnp.bfloat16)
    else:
        m2 = jnp.broadcast_to(m, (b, n_pre)).astype(jnp.bfloat16)

    # Pad rows to a multiple of 8 (sublane-dense out stores, matters on v5e) and the
    # terminal axis up to the config-padded weight rows (cheap: activations only).
    b_p = _round_up(b, 8)
    pad_b, pad_k = b_p - b, n_pre_p - n_pre
    if pad_b or pad_k:
        e2 = jnp.pad(e2, ((0, pad_b), (0, pad_k)))
    pad_mb = (b_p - m2.shape[0]) if m2.shape[0] == b else 0
    if pad_mb or pad_k:
        m2 = jnp.pad(m2, ((0, pad_mb), (0, pad_k)))
    mb = m2.shape[0]

    # Chip-aware VMEM budget/limit (v5e/v6e: 128 MiB physical; v7x: 64 MiB per TC).
    cap = _vmem_capacity_bytes()
    big_vmem = cap >= (100 << 20)
    if vmem_budget_bytes is None:
        vmem_budget_bytes = (64 << 20) if big_vmem else (44 << 20)
    limit_cap = (96 << 20) if big_vmem else (56 << 20)

    resident, tk, tn, footprint = _plan_tiles(b_p, mb, n_pre_p, n_post_p, vmem_budget_bytes)
    vmem_limit = int(min(limit_cap, max(footprint + footprint // 4 + (8 << 20), 16 << 20)))

    grid = (n_post_p // tn, n_pre_p // tk)  # (parallel columns, reduction last)

    if resident:
        e_spec = pl.BlockSpec((b_p, n_pre_p), lambda j, k: (0, 0))   # fetched once
        m_spec = pl.BlockSpec((mb, n_pre_p), lambda j, k: (0, 0))    # fetched once
        scratch = [pltpu.VMEM((b_p, n_pre_p), jnp.bfloat16)]         # (e*mask) in bf16
    else:
        e_spec = pl.BlockSpec((b_p, tk), lambda j, k: (0, k))        # streamed per K tile
        m_spec = pl.BlockSpec((mb, tk), lambda j, k: (0, k))
        scratch = []

    out = pl.pallas_call(
        functools.partial(_synapse_kernel, tk=tk, resident=resident),
        out_shape=jax.ShapeDtypeStruct((b_p, n_post_p), jnp.float32),
        grid_spec=pltpu.PrefetchScalarGridSpec(
            num_scalar_prefetch=0,
            grid=grid,
            in_specs=[
                e_spec,
                m_spec,
                pl.BlockSpec((tk, tn), lambda j, k: (k, j)),         # bf16 W stream
            ],
            out_specs=pl.BlockSpec((b_p, tn), lambda j, k: (0, j)),  # resident f32 acc over k
            scratch_shapes=scratch,
        ),
        compiler_params=pltpu.CompilerParams(
            dimension_semantics=("parallel", "arbitrary"),
            vmem_limit_bytes=vmem_limit,
        ),
        cost_estimate=pl.CostEstimate(
            flops=2 * b_p * n_pre_p * n_post_p,
            transcendentals=0,
            bytes_accessed=e2.size * 4 + m2.size * 2 + w_eff.size * 2 + b_p * n_post_p * 4,
        ),
    )(e2, m2, w_eff)

    out = out[:b, :n_post]
    return out if batched else out[0]


if __name__ == "__main__":
    # Small, module-consistent sizes: 512 pre-synaptic terminals, 256 post neurons,
    # 8 batched masks/timesteps (batched into the MXU M dimension).
    N_PRE, N_POST, B = 512, 256, 8

    key = jax.random.PRNGKey(0)
    k_e, k_m, k_w, k_c, k_p = jax.random.split(key, 5)

    e = jax.random.uniform(k_e, (B, N_PRE), dtype=jnp.float32)        # neurotransmitter release
    mask = jax.random.uniform(k_m, (B, N_PRE)) > 0.3                  # boolean gating masks
    w = jax.random.normal(k_w, (N_PRE, N_POST), dtype=jnp.float32) * 0.05
    connectivity = jax.random.uniform(k_c, (N_PRE, N_POST)) > 0.2     # FilterSynapseSet filter
    passage = jax.random.uniform(k_p, (N_PRE, N_POST)) > 0.9          # forced "no contribution"

    # Config-time (once): fold connectivity / passage and all layout padding into bf16 weights.
    w_eff, n_post = precompute_effective_weights(w, connectivity, passage)

    out = jax.block_until_ready(filter_synapse_forward(e, mask, w_eff, n_post=n_post))

    # Pure-JAX reference with identical bf16 quantization of the MXU operands.
    em = (e * mask.astype(jnp.float32)).astype(jnp.bfloat16).astype(jnp.float32)
    ref = jnp.dot(em, w_eff[:N_PRE, :N_POST].astype(jnp.float32),
                  precision=jax.lax.Precision.HIGHEST)
    assert out.shape == (B, N_POST)
    assert jnp.allclose(out, ref, atol=2e-3, rtol=2e-3), "mismatch vs reference"

    # Also exercise the tiled-reduction + streamed-activation path (what v7x-sized
    # problems would take) by forcing a tiny VMEM budget.
    out2 = jax.block_until_ready(
        filter_synapse_forward(e, mask, w_eff, n_post=n_post, vmem_budget_bytes=100_000))
    assert jnp.allclose(out2, ref, atol=2e-3, rtol=2e-3), "mismatch vs reference (tiled path)"

    print("KERNEL_OK")
</pallas_src>

<mosaic_0001>
module attributes {stable_mosaic.version = 11 : i64} {
  func.func @_synapse_kernel(%arg0: i32, %arg1: i32, %arg2: memref<8x512xf32, #tpu.memory_space<vmem>>, %arg3: memref<8x512xbf16, #tpu.memory_space<vmem>>, %arg4: memref<512x128xbf16, #tpu.memory_space<vmem>>, %arg5: memref<8x128xf32, #tpu.memory_space<vmem>>, %arg6: memref<8x512xbf16, #tpu.memory_space<vmem>>) attributes {dimension_semantics = [#tpu.dimension_semantics<parallel>, #tpu.dimension_semantics<arbitrary>], iteration_bounds = array<i64: 2, 1>, scalar_prefetch = 0 : i64, scratch_operands = 1 : i64, tpu.core_type = #tpu.core_type<tc>, window_params = [{pipeline_mode = #tpu.pipeline_mode<synchronous>, transform_indices = @transform_0, window_bounds = array<i64: 8, 512>}, {pipeline_mode = #tpu.pipeline_mode<synchronous>, transform_indices = @transform_1, window_bounds = array<i64: 8, 512>}, {transform_indices = @transform_2, window_bounds = array<i64: 512, 128>}, {transform_indices = @transform_3, window_bounds = array<i64: 8, 128>}]} {
    %c0_i32 = arith.constant 0 : i32
    %0 = arith.cmpi eq, %arg1, %c0_i32 : i32
    %1 = arith.extui %0 : i1 to i32
    %c0_i32_0 = arith.constant 0 : i32
    %2 = arith.cmpi ne, %1, %c0_i32_0 : i32
    scf.if %2 {
      %cst_9 = arith.constant 0.000000e+00 : f32
      %15 = vector.broadcast %cst_9 : f32 to vector<8x128xf32>
      %c0_10 = arith.constant 0 : index
      %c0_11 = arith.constant 0 : index
      %16 = vector.load %arg5[%c0_10, %c0_11] : memref<8x128xf32, #tpu.memory_space<vmem>>, vector<8x128xf32>
      tpu.vector_store %arg5[%c0_10, %c0_11], %15 {strides = array<i32>} : memref<8x128xf32, #tpu.memory_space<vmem>>, vector<8x128xf32>,
    } else {
    }
    %c0_i32_1 = arith.constant 0 : i32
    %3 = arith.cmpi eq, %arg1, %c0_i32_1 : i32
    %4 = arith.extui %3 : i1 to i32
    %c0_i32_2 = arith.constant 0 : i32
    %5 = arith.cmpi ne, %4, %c0_i32_2 : i32
    scf.if %5 {
      %c0_9 = arith.constant 0 : index
      %c0_10 = arith.constant 0 : index
      %15 = vector.load %arg2[%c0_9, %c0_10] : memref<8x512xf32, #tpu.memory_space<vmem>>, vector<8x512xf32>
      %c0_11 = arith.constant 0 : index
      %c0_12 = arith.constant 0 : index
      %16 = vector.load %arg3[%c0_11, %c0_12] : memref<8x512xbf16, #tpu.memory_space<vmem>>, vector<8x512xbf16>
      %17 = arith.extf %16 : vector<8x512xbf16> to vector<8x512xf32>
      %18 = arith.mulf %15, %17 : vector<8x512xf32>
      %19 = arith.truncf %18 : vector<8x512xf32> to vector<8x512xbf16>
      %c0_13 = arith.constant 0 : index
      %c0_14 = arith.constant 0 : index
      %20 = vector.load %arg6[%c0_13, %c0_14] : memref<8x512xbf16, #tpu.memory_space<vmem>>, vector<8x512xbf16>
      tpu.vector_store %arg6[%c0_13, %c0_14], %19 {strides = array<i32>} : memref<8x512xbf16, #tpu.memory_space<vmem>>, vector<8x512xbf16>,
    } else {
    }
    %c512_i32 = arith.constant 512 : i32
    %6 = arith.muli %arg1, %c512_i32 : i32
    %7 = tpu.assume_multiple %6, 512 : i32
    %c0 = arith.constant 0 : index
    %8 = arith.index_cast %7 : i32 to index
    %9 = vector.load %arg6[%c0, %8] : memref<8x512xbf16, #tpu.memory_space<vmem>>, vector<8x512xbf16>
    %c0_3 = arith.constant 0 : index
    %c0_4 = arith.constant 0 : index
    %10 = vector.load %arg5[%c0_3, %c0_4] : memref<8x128xf32, #tpu.memory_space<vmem>>, vector<8x128xf32>
    %c0_5 = arith.constant 0 : index
    %c0_6 = arith.constant 0 : index
    %11 = vector.load %arg4[%c0_5, %c0_6] : memref<512x128xbf16, #tpu.memory_space<vmem>>, vector<512x128xbf16>
    %cst = arith.constant dense<0.000000e+00> : vector<8x128xf32>
    %12 = tpu.matmul %9, %11, %cst {dimension_numbers = #tpu.dot_dimension_numbers<[1], [0], [0], [1], [0, 0, 1, 1], [], []>} : vector<8x512xbf16>, vector<512x128xbf16>, vector<8x128xf32> -> vector<8x128xf32>
    %13 = arith.addf %10, %12 : vector<8x128xf32>
    %c0_7 = arith.constant 0 : index
    %c0_8 = arith.constant 0 : index
    %14 = vector.load %arg5[%c0_7, %c0_8] : memref<8x128xf32, #tpu.memory_space<vmem>>, vector<8x128xf32>
    tpu.vector_store %arg5[%c0_7, %c0_8], %13 {strides = array<i32>} : memref<8x128xf32, #tpu.memory_space<vmem>>, vector<8x128xf32>,
    return
  }
  func.func @transform_0(%arg0: i32, %arg1: i32) -> (i32, i32) {
    %c0_i32 = arith.constant 0 : i32
    %c0_i32_0 = arith.constant 0 : i32
    %c0_i32_1 = arith.constant 0 : i32
    return %c0_i32, %c0_i32_0 : i32, i32
  }
  func.func @transform_1(%arg0: i32, %arg1: i32) -> (i32, i32) {
    %c0_i32 = arith.constant 0 : i32
    %c0_i32_0 = arith.constant 0 : i32
    %c0_i32_1 = arith.constant 0 : i32
    return %c0_i32, %c0_i32_0 : i32, i32
  }
  func.func @transform_2(%arg0: i32, %arg1: i32) -> (i32, i32) {
    %c0_i32 = arith.constant 0 : i32
    return %arg1, %arg0 : i32, i32
  }
  func.func @transform_3(%arg0: i32, %arg1: i32) -> (i32, i32) {
    %c0_i32 = arith.constant 0 : i32
    %c0_i32_0 = arith.constant 0 : i32
    return %c0_i32, %arg0 : i32, i32
  }
}

</mosaic_0001>

<llo_original>
// kernel: tpu_custom_call.1
$region0: #{tpu_custom_call.1}
  #allocation0 [shape = 'u32[]', space=smem, size = 0x4, offset = 0x4, fixed_abs, tag = 'smem constant byte address 0x4 - core index']
  #allocation1 [shape = 'u32[72,128]{1,0:T(1,128)}', space=vmem, size = 0x9000, scoped, tag = 'internal scratch']
  #allocation2 [shape = 'bf16[8,512]{1,0:T(8,128)(2,1)}', space=vmem, size = 0x2000, scoped, tag = 'scratch operand']
  %s0 = inlined_call_operand.hbm [shape: f32[8,512], index: 0, kind: input, shape index: {}]
  %s1 = inlined_call_operand.hbm [shape: bf16[8,512], index: 1, kind: input, shape index: {}]
  %s2 = inlined_call_operand.hbm [shape: bf16[512,256], index: 2, kind: input, shape index: {}]
  %s3 = inlined_call_operand.hbm [shape: f32[8,256], index: 3, kind: output, shape index: {}]
  %s4 = sld [smem:[#allocation0]]
  $region61: #{tpu_custom_call.1} parent=0
    _
  %s6 = ssub.s32 1, %s4
  %s7 = scalar_select 0, %s6, %s4
  $region1: #{tpu_custom_call.1} parent=0
    #allocation3 [shape = 'u8[16384]{0}', space=vmem, size = 0x4000, scoped, tag = 'input window, operand 0, single buffered']
    #allocation4 [shape = 's32[2]{0}', space=sflag, size = 0x8, scoped, tag = 'scoped memory for tpu_custom_call.1']
    #allocation5 [shape = 's32[2]{0}', space=sflag, size = 0x8, scoped, tag = 'scoped memory for tpu_custom_call.1']
    #allocation6 [shape = 'u8[8192]{0}', space=vmem, size = 0x2000, scoped, tag = 'input window, operand 1, single buffered']
    #allocation7 [shape = 's32[1]{0}', space=sflag, size = 0x4, scoped, tag = 'scoped memory for tpu_custom_call.1']
    #allocation8 [shape = 'u8[262144]{0}', space=vmem, size = 0x40000, scoped, tag = 'input window, operand 2']
    #allocation9 [shape = 'u8[8192]{0}', space=vmem, size = 0x2000, scoped, tag = 'output window, operand 0']
    %8 = vsyncpa [#allocation4], 0
    %9 = vsyncpa [#allocation7], 0
    %10 = vsyncpa [#allocation5], 0
    %s11 = scalar_lea.sflag [#allocation5], 1
    %12 = vsyncpa %s11, 0
    loop: start=0, step=1, limit=4
    $region2: #{tpu_custom_call.1} parent=1 // loop_pre_header
      _
    $region3: #{tpu_custom_call.1} parent=1 // loop_header
      %s14 = sphi 0, %s18
      %p15 = scmp.ge.s32.totalorder %s14, 4
      %s21 = sphi 0, %s33
      %s22 = sphi 0, %s29
      %s23 = sphi 0, %s21
      %s24 = sphi 0, %s22
      %s25 = sphi 0, %s23
      %s26 = sphi 0, %s24
      %s34 = sphi 0, %s34
      %s36 = sphi 0, %s34
      %s37 = sphi 0, %s36
      %s51 = sphi 0, %s37
      %s55 = sphi 0, %s55
      %s57 = sphi 0, %s55
      %s58 = sphi 0, %s57
      %s72 = sphi 0, %s58
      %s80 = sphi 0, %s82
      %s83 = sphi 0, %s80
      %s84 = sphi 0, %s83
      %s100 = sphi 0, %s84
      %s106 = sphi 0, %s108
      %s109 = sphi 0, %s106
      %s110 = sphi 0, %s109
      %s126 = sphi 0, %s110
    $region4: #{tpu_custom_call.1} parent=1 // loop_header_branch
      %17 = sbr.rel (%p15) target = $region8
    $region5: #{tpu_custom_call.1} parent=1 // loop_body
      %s19 = ssub.s32 %s14, 1
      %s20 = ssub.s32 %s14, 2
      %s27 = sadd.s32 1, %s22
      %p28 = scmp.ge.s32.totalorder %s27, 1
      %s29 = scalar_select %p28, 0, %s27
      %s30 = sadd.s32 1, %s21
      %s31 = scalar_select %p28, %s30, %s21
      %p32 = scmp.ge.s32.totalorder %s31, 2
      %s33 = scalar_select %p32, 0, %s31
      %s35 = sadd.s32 %s34, 1
      %p38 = scmp.eq.s32.totalorder %s14, 1
      %p39 = scmp.ne.s32.totalorder %s34, %s36
      %p40 = scmp.eq.s32.totalorder %s14, 0
      %p41 = por %p39, %p40
      %p42 = scmp.ne.s32.totalorder %s34, %s36
      %p43 = scmp.eq.s32.totalorder %s19, 1
      %p44 = por %p42, %p43
      %p45 = scmp.ne.s32.totalorder %s36, %s37
      %p46 = scmp.eq.s32.totalorder %s19, 0
      %p47 = por %p45, %p46
      %p48 = scmp.ne.s32.totalorder %s36, %s37
      %p49 = scmp.eq.s32.totalorder %s20, 1
      %p50 = por %p48, %p49
      %p52 = scmp.ne.s32.totalorder %s37, %s51
      %p53 = scmp.eq.s32.totalorder %s20, 0
      %p54 = por %p52, %p53
      %s56 = sadd.s32 %s55, 1
      %p59 = scmp.eq.s32.totalorder %s14, 1
      %p60 = scmp.ne.s32.totalorder %s55, %s57
      %p61 = scmp.eq.s32.totalorder %s14, 0
      %p62 = por %p60, %p61
      %p63 = scmp.ne.s32.totalorder %s55, %s57
      %p64 = scmp.eq.s32.totalorder %s19, 1
      %p65 = por %p63, %p64
      %p66 = scmp.ne.s32.totalorder %s57, %s58
      %p67 = scmp.eq.s32.totalorder %s19, 0
      %p68 = por %p66, %p67
      %p69 = scmp.ne.s32.totalorder %s57, %s58
      %p70 = scmp.eq.s32.totalorder %s20, 1
      %p71 = por %p69, %p70
      %p73 = scmp.ne.s32.totalorder %s58, %s72
      %p74 = scmp.eq.s32.totalorder %s20, 0
      %p75 = por %p73, %p74
      %s76 = ssub.s32 %s22, %s29
      %s77 = ssub.s32 %s21, %s33
      %s78 = sor.u32 %s76, %s77
      %p79 = scmp.eq.s32.totalorder %s78, 0
      %s81 = sadd.s32 %s80, 1
      %s82 = scalar_select %p79, %s80, %s81
      %p85 = pneg %p79
      %p86 = scmp.eq.s32.totalorder %s14, 1
      %p87 = por %p85, %p86
      %p88 = scmp.ne.s32.totalorder %s80, %s83
      %p89 = scmp.eq.s32.totalorder %s14, 0
      %p90 = por %p88, %p89
      %p91 = scmp.ne.s32.totalorder %s80, %s83
      %p92 = scmp.eq.s32.totalorder %s19, 1
      %p93 = por %p91, %p92
      %p94 = scmp.ne.s32.totalorder %s83, %s84
      %p95 = scmp.eq.s32.totalorder %s19, 0
      %p96 = por %p94, %p95
      %p97 = scmp.ne.s32.totalorder %s83, %s84
      %p98 = scmp.eq.s32.totalorder %s20, 1
      %p99 = por %p97, %p98
      %p101 = scmp.ne.s32.totalorder %s84, %s100
      %p102 = scmp.eq.s32.totalorder %s20, 0
      %p103 = por %p101, %p102
      %s104 = ssub.s32 %s21, %s33
      %p105 = scmp.eq.s32.totalorder %s104, 0
      %s107 = sadd.s32 %s106, 1
      %s108 = scalar_select %p105, %s106, %s107
      %p111 = pneg %p105
      %p112 = scmp.eq.s32.totalorder %s14, 1
      %p113 = por %p111, %p112
      %p114 = scmp.ne.s32.totalorder %s106, %s109
      %p115 = scmp.eq.s32.totalorder %s14, 0
      %p116 = por %p114, %p115
      %p117 = scmp.ne.s32.totalorder %s106, %s109
      %p118 = scmp.eq.s32.totalorder %s19, 1
      %p119 = por %p117, %p118
      %p120 = scmp.ne.s32.totalorder %s109, %s110
      %p121 = scmp.eq.s32.totalorder %s19, 0
      %p122 = por %p120, %p121
      %p123 = scmp.ne.s32.totalorder %s109, %s110
      %p124 = scmp.eq.s32.totalorder %s20, 1
      %p125 = por %p123, %p124
      %p127 = scmp.ne.s32.totalorder %s110, %s126
      %p128 = scmp.eq.s32.totalorder %s20, 0
      %p129 = por %p127, %p128
      %p130 = scmp.le.s32.totalorder 1, %s14
      %p131 = scmp.lt.s32.totalorder %s14, 3
      %p132 = pnand %p130, %p131
      %p133 = pneg %p132
      // Predicated region
      $region9: #{tpu_custom_call.1} parent=5 // pred_check
        _
      $region10: #{tpu_custom_call.1} parent=5 // pred_check_branch
        %135 = sbr.rel (%p132) target = $region12
      $region11: #{tpu_custom_call.1} parent=5 // pred_region
        %s136 = ssub.s32 %s14, 1
        // Predicated region
        $region13: #{tpu_custom_call.1} parent=11 // pred_check
          %p137 = pneg %p47
        $region14: #{tpu_custom_call.1} parent=11 // pred_check_branch
          %139 = sbr.rel (%p137) target = $region16
        $region15: #{tpu_custom_call.1} parent=11 // pred_region
          %141 = vsyncadd [#allocation4], 0
          %s143 = sshll.u32 %s0, 4
          %s144 = int_to_ptr.hbm [resolvable:$true] %s143
          %s145 = sshll.u32 [#allocation3], 4
          %s146 = int_to_ptr.vmem [resolvable:$true] %s145
          %148 = dma.hbm_to_vmem [thread:$0]  %s144, 512, %s146, [#allocation4]
        $region16: #{tpu_custom_call.1} parent=11 // pred_fallthru
          _
        // Predicated region
        $region17: #{tpu_custom_call.1} parent=11 // pred_check
          %p149 = pneg %p68
        $region18: #{tpu_custom_call.1} parent=11 // pred_check_branch
          %151 = sbr.rel (%p149) target = $region20
        $region19: #{tpu_custom_call.1} parent=11 // pred_region
          %153 = vsyncadd [#allocation7], 0
          %s155 = sshll.u32 %s1, 4
          %s156 = int_to_ptr.hbm [resolvable:$true] %s155
          %s157 = sshll.u32 [#allocation6], 4
          %s158 = int_to_ptr.vmem [resolvable:$true] %s157
          %160 = dma.hbm_to_vmem [thread:$0]  %s156, 256, %s158, [#allocation7]
        $region20: #{tpu_custom_call.1} parent=11 // pred_fallthru
          _
      $region12: #{tpu_custom_call.1} parent=5 // pred_fallthru
        _
      %p161 = scmp.lt.s32.totalorder %s14, 2
      // Predicated region
      $region21: #{tpu_custom_call.1} parent=5 // pred_check
        %p162 = pneg %p161
      $region22: #{tpu_custom_call.1} parent=5 // pred_check_branch
        %164 = sbr.rel (%p162) target = $region24
      $region23: #{tpu_custom_call.1} parent=5 // pred_region
        // Predicated region
        $region25: #{tpu_custom_call.1} parent=23 // pred_check
          %p165 = pneg %p90
        $region26: #{tpu_custom_call.1} parent=23 // pred_check_branch
          %167 = sbr.rel (%p165) target = $region28
        $region27: #{tpu_custom_call.1} parent=23 // pred_region
          %s168 = sand.u32 %s14, 1
          %s169 = scalar_lea.sflag [#allocation4], %s168
          %s170 = sand.u32 %s80, 1
          %s171 = smul.addr %s170, 256
          %s172 = scalar_lea.vmem [#allocation8], %s171
          %s173 = smul.u32 64, %s22
          %175 = vsyncadd %s169, 0
          %s176 = smul.addr %s173, 2
          %s177 = sadd.s32 %s21, %s176
          %s178 = smul.addr %s177, 4
          %s179 = scalar_lea.hbm %s2, %s178
          %s180 = sshll.u32 %s179, 4
          %s181 = int_to_ptr.hbm [resolvable:$true] %s180
          %s182 = sshll.u32 %s172, 4
          %s183 = int_to_ptr.vmem [resolvable:$true] %s182
          %188 = dma.hbm_to_vmem [thread:$0]  %s181, 4096, %s183, %s169, 128, 64, 4
        $region28: #{tpu_custom_call.1} parent=23 // pred_fallthru
          _
      $region24: #{tpu_custom_call.1} parent=5 // pred_fallthru
        _
      %p189 = scmp.le.s32.totalorder 1, %s14
      %p190 = scmp.lt.s32.totalorder %s14, 3
      %p191 = pnand %p189, %p190
      %p192 = pneg %p191
      // Predicated region
      $region29: #{tpu_custom_call.1} parent=5 // pred_check
        _
      $region30: #{tpu_custom_call.1} parent=5 // pred_check_branch
        %194 = sbr.rel (%p191) target = $region32
      $region31: #{tpu_custom_call.1} parent=5 // pred_region
        %s195 = ssub.s32 %s14, 1
        // Predicated region
        $region33: #{tpu_custom_call.1} parent=31 // pred_check
          %p196 = pneg %p47
        $region34: #{tpu_custom_call.1} parent=31 // pred_check_branch
          %198 = sbr.rel (%p196) target = $region36
        $region35: #{tpu_custom_call.1} parent=31 // pred_region
          %200 = dma.done [#allocation4], 512
        $region36: #{tpu_custom_call.1} parent=31 // pred_fallthru
          _
        // Predicated region
        $region37: #{tpu_custom_call.1} parent=31 // pred_check
          %p201 = pneg %p68
        $region38: #{tpu_custom_call.1} parent=31 // pred_check_branch
          %203 = sbr.rel (%p201) target = $region40
        $region39: #{tpu_custom_call.1} parent=31 // pred_region
          %205 = dma.done [#allocation7], 256
        $region40: #{tpu_custom_call.1} parent=31 // pred_fallthru
          _
        %s206 = sand.u32 %s19, 1
        %s207 = scalar_lea.sflag [#allocation4], %s206
        %s208 = sand.u32 %s83, 1
        %s209 = smul.addr %s208, 256
        %s210 = scalar_lea.vmem [#allocation8], %s209
        // Predicated region
        $region41: #{tpu_custom_call.1} parent=31 // pred_check
          %p211 = pneg %p96
        $region42: #{tpu_custom_call.1} parent=31 // pred_check_branch
          %213 = sbr.rel (%p211) target = $region44
        $region43: #{tpu_custom_call.1} parent=31 // pred_region
          %215 = dma.done %s207, 4096
        $region44: #{tpu_custom_call.1} parent=31 // pred_fallthru
          _
        %p216 = pneg %p47
        %p217 = pneg %p44
        %p218 = pneg %p68
        %p219 = pneg %p65
        %s220 = sand.u32 %s19, 1
        %s221 = scalar_lea.sflag [#allocation4], %s220
        %s222 = sand.u32 %s83, 1
        %s223 = smul.addr %s222, 256
        %s224 = scalar_lea.vmem [#allocation8], %s223
        %p225 = pneg %p96
        %p226 = pneg %p93
        %p227 = pneg %p122
        %p228 = pneg %p119
        %s229 = sand.u32 %s109, 1
        %s230 = scalar_lea.sflag [#allocation5], %s229
        %s231 = sand.u32 %s109, 1
        %s232 = smul.addr %s231, 8
        %s233 = scalar_lea.vmem [#allocation9], %s232
        %s234 = smul.u32 64, %s24
        %p235 = scmp.eq.s32.totalorder %s24, 0
        // Predicated region
        $region45: #{tpu_custom_call.1} parent=31 // pred_check
          %p236 = pneg %p235
        $region46: #{tpu_custom_call.1} parent=31 // pred_check_branch
          %238 = sbr.rel (%p236) target = $region48
        $region47: #{tpu_custom_call.1} parent=31 // pred_region
          %239 = vst [vmem:[%s233] sm:$0xff] 0.0
          %v240 = vld [vmem:[#allocation3] sm:$0xff]
          %v241 = vld [vmem:[#allocation3 + $0x8] sm:$0xff]
          %v242 = vld [vmem:[#allocation3 + $0x10] sm:$0xff]
          %v243 = vld [vmem:[#allocation3 + $0x18] sm:$0xff]
          %v244 = vld [vmem:[#allocation6] sm:$0xff]
          %v245 = vld [vmem:[#allocation6 + $0x8] sm:$0xff]
          %v246 = vunpack.c.l.bf16 %v244
          %v247 = vunpack.c.h.bf16 %v244
          %v248 = vunpack.c.l.bf16 %v245
          %v249 = vunpack.c.h.bf16 %v245
          %v250 = vmul.f32 %v240, %v246
          %v251 = vmul.f32 %v241, %v247
          %v252 = vmul.f32 %v242, %v248
          %v253 = vmul.f32 %v243, %v249
          %v254 = vpack.c.bf16 %v251, %v250
          %v255 = vpack.c.bf16 %v253, %v252
          %256 = vst [vmem:[#allocation2] sm:$0xff] %v254
          %257 = vst [vmem:[#allocation2 + $0x8] sm:$0xff] %v255
        $region48: #{tpu_custom_call.1} parent=31 // pred_fallthru
          _
        %s258 = smul.u32 %s24, 512
        %s259 = sshra.s32 %s258, 7
        %s260 = sand.u32 %s258, 127
        %s261 = smul.addr %s259, 4
        %s262 = scalar_lea.vmem [#allocation2], %s261
        %v263 = vld [vmem:[%s262] sm:$0xff]
        %v264 = vld [vmem:[%s262 + $0x8] sm:$0xff]
        %v265 = vld [vmem:[%s233] sm:$0xff]
        %v266 = vld [vmem:[%s210] sm:$0xf]
        %v267 = vld [vmem:[%s210 + $0x4] sm:$0xf]
        %v268 = vld [vmem:[%s210 + $0x8] sm:$0xf]
        %v269 = vld [vmem:[%s210 + $0xc] sm:$0xf]
        %v270 = vld [vmem:[%s210 + $0x10] sm:$0xf]
        %v271 = vld [vmem:[%s210 + $0x14] sm:$0xf]
        %v272 = vld [vmem:[%s210 + $0x18] sm:$0xf]
        %v273 = vld [vmem:[%s210 + $0x1c] sm:$0xf]
        %v274 = vld [vmem:[%s210 + $0x20] sm:$0xf]
        %v275 = vld [vmem:[%s210 + $0x24] sm:$0xf]
        %v276 = vld [vmem:[%s210 + $0x28] sm:$0xf]
        %v277 = vld [vmem:[%s210 + $0x2c] sm:$0xf]
        %v278 = vld [vmem:[%s210 + $0x30] sm:$0xf]
        %v279 = vld [vmem:[%s210 + $0x34] sm:$0xf]
        %v280 = vld [vmem:[%s210 + $0x38] sm:$0xf]
        %v281 = vld [vmem:[%s210 + $0x3c] sm:$0xf]
        %v282 = vld [vmem:[%s210 + $0x40] sm:$0xf]
        %v283 = vld [vmem:[%s210 + $0x44] sm:$0xf]
        %v284 = vld [vmem:[%s210 + $0x48] sm:$0xf]
        %v285 = vld [vmem:[%s210 + $0x4c] sm:$0xf]
        %v286 = vld [vmem:[%s210 + $0x50] sm:$0xf]
        %v287 = vld [vmem:[%s210 + $0x54] sm:$0xf]
        %v288 = vld [vmem:[%s210 + $0x58] sm:$0xf]
        %v289 = vld [vmem:[%s210 + $0x5c] sm:$0xf]
        %v290 = vld [vmem:[%s210 + $0x60] sm:$0xf]
        %v291 = vld [vmem:[%s210 + $0x64] sm:$0xf]
        %v292 = vld [vmem:[%s210 + $0x68] sm:$0xf]
        %v293 = vld [vmem:[%s210 + $0x6c] sm:$0xf]
        %v294 = vld [vmem:[%s210 + $0x70] sm:$0xf]
        %v295 = vld [vmem:[%s210 + $0x74] sm:$0xf]
        %v296 = vld [vmem:[%s210 + $0x78] sm:$0xf]
        %v297 = vld [vmem:[%s210 + $0x7c] sm:$0xf]
        %v298 = vld [vmem:[%s210 + $0x80] sm:$0xf]
        %v299 = vld [vmem:[%s210 + $0x84] sm:$0xf]
        %v300 = vld [vmem:[%s210 + $0x88] sm:$0xf]
        %v301 = vld [vmem:[%s210 + $0x8c] sm:$0xf]
        %v302 = vld [vmem:[%s210 + $0x90] sm:$0xf]
        %v303 = vld [vmem:[%s210 + $0x94] sm:$0xf]
        %v304 = vld [vmem:[%s210 + $0x98] sm:$0xf]
        %v305 = vld [vmem:[%s210 + $0x9c] sm:$0xf]
        %v306 = vld [vmem:[%s210 + $0xa0] sm:$0xf]
        %v307 = vld [vmem:[%s210 + $0xa4] sm:$0xf]
        %v308 = vld [vmem:[%s210 + $0xa8] sm:$0xf]
        %v309 = vld [vmem:[%s210 + $0xac] sm:$0xf]
        %v310 = vld [vmem:[%s210 + $0xb0] sm:$0xf]
        %v311 = vld [vmem:[%s210 + $0xb4] sm:$0xf]
        %v312 = vld [vmem:[%s210 + $0xb8] sm:$0xf]
        %v313 = vld [vmem:[%s210 + $0xbc] sm:$0xf]
        %v314 = vld [vmem:[%s210 + $0xc0] sm:$0xf]
        %v315 = vld [vmem:[%s210 + $0xc4] sm:$0xf]
        %v316 = vld [vmem:[%s210 + $0xc8] sm:$0xf]
        %v317 = vld [vmem:[%s210 + $0xcc] sm:$0xf]
        %v318 = vld [vmem:[%s210 + $0xd0] sm:$0xf]
        %v319 = vld [vmem:[%s210 + $0xd4] sm:$0xf]
        %v320 = vld [vmem:[%s210 + $0xd8] sm:$0xf]
        %v321 = vld [vmem:[%s210 + $0xdc] sm:$0xf]
        %v322 = vld [vmem:[%s210 + $0xe0] sm:$0xf]
        %v323 = vld [vmem:[%s210 + $0xe4] sm:$0xf]
        %v324 = vld [vmem:[%s210 + $0xe8] sm:$0xf]
        %v325 = vld [vmem:[%s210 + $0xec] sm:$0xf]
        %v326 = vld [vmem:[%s210 + $0xf0] sm:$0xf]
        %v327 = vld [vmem:[%s210 + $0xf4] sm:$0xf]
        %v328 = vld [vmem:[%s210 + $0xf8] sm:$0xf]
        %v329 = vld [vmem:[%s210 + $0xfc] sm:$0xf]
        %v332 = vunpack.c.l.b16 %v263
        %v333 = vunpack.c.h.b16 %v263
        %v334 = vunpack.c.l.b16 %v264
        %v335 = vunpack.c.h.b16 %v264
        %v336 = vpack.c.b16 %v332, %v332
        %v337 = vpack.c.b16 %v333, %v333
        %v338 = vpack.c.b16 %v334, %v334
        %v339 = vpack.c.b16 %v335, %v335
        %v408 = vunpack.c.l.b16 %v266
        %v409 = vunpack.c.l.b16 %v267
        %v410 = vunpack.c.l.b16 %v268
        %v411 = vunpack.c.l.b16 %v269
        %v412 = vunpack.c.l.b16 %v270
        %v413 = vunpack.c.l.b16 %v271
        %v414 = vunpack.c.l.b16 %v272
        %v415 = vunpack.c.l.b16 %v273
        %v416 = vunpack.c.l.b16 %v274
        %v417 = vunpack.c.l.b16 %v275
        %v418 = vunpack.c.l.b16 %v276
        %v419 = vunpack.c.l.b16 %v277
        %v420 = vunpack.c.l.b16 %v278
        %v421 = vunpack.c.l.b16 %v279
        %v422 = vunpack.c.l.b16 %v280
        %v423 = vunpack.c.l.b16 %v281
        %v424 = vunpack.c.l.b16 %v282
        %v425 = vunpack.c.l.b16 %v283
        %v426 = vunpack.c.l.b16 %v284
        %v427 = vunpack.c.l.b16 %v285
        %v428 = vunpack.c.l.b16 %v286
        %v429 = vunpack.c.l.b16 %v287
        %v430 = vunpack.c.l.b16 %v288
        %v431 = vunpack.c.l.b16 %v289
        %v432 = vunpack.c.l.b16 %v290
        %v433 = vunpack.c.l.b16 %v291
        %v434 = vunpack.c.l.b16 %v292
        %v435 = vunpack.c.l.b16 %v293
        %v436 = vunpack.c.l.b16 %v294
        %v437 = vunpack.c.l.b16 %v295
        %v438 = vunpack.c.l.b16 %v296
        %v439 = vunpack.c.l.b16 %v297
        %v440 = vunpack.c.l.b16 %v298
        %v441 = vunpack.c.l.b16 %v299
        %v442 = vunpack.c.l.b16 %v300
        %v443 = vunpack.c.l.b16 %v301
        %v444 = vunpack.c.l.b16 %v302
        %v445 = vunpack.c.l.b16 %v303
        %v446 = vunpack.c.l.b16 %v304
        %v447 = vunpack.c.l.b16 %v305
        %v448 = vunpack.c.l.b16 %v306
        %v449 = vunpack.c.l.b16 %v307
        %v450 = vunpack.c.l.b16 %v308
        %v451 = vunpack.c.l.b16 %v309
        %v452 = vunpack.c.l.b16 %v310
        %v453 = vunpack.c.l.b16 %v311
        %v454 = vunpack.c.l.b16 %v312
        %v455 = vunpack.c.l.b16 %v313
        %v456 = vunpack.c.l.b16 %v314
        %v457 = vunpack.c.l.b16 %v315
        %v458 = vunpack.c.l.b16 %v316
        %v459 = vunpack.c.l.b16 %v317
        %v460 = vunpack.c.l.b16 %v318
        %v461 = vunpack.c.l.b16 %v319
        %v462 = vunpack.c.l.b16 %v320
        %v463 = vunpack.c.l.b16 %v321
        %v464 = vunpack.c.l.b16 %v322
        %v465 = vunpack.c.l.b16 %v323
        %v466 = vunpack.c.l.b16 %v324
        %v467 = vunpack.c.l.b16 %v325
        %v468 = vunpack.c.l.b16 %v326
        %v469 = vunpack.c.l.b16 %v327
        %v470 = vunpack.c.l.b16 %v328
        %v471 = vunpack.c.l.b16 %v329
        %v472 = vpack.c.b16 %v409, %v408
        %v473 = vpack.c.b16 %v411, %v410
        %v474 = vpack.c.b16 %v413, %v412
        %v475 = vpack.c.b16 %v415, %v414
        %v476 = vpack.c.b16 %v417, %v416
        %v477 = vpack.c.b16 %v419, %v418
        %v478 = vpack.c.b16 %v421, %v420
        %v479 = vpack.c.b16 %v423, %v422
        %v480 = vpack.c.b16 %v425, %v424
        %v481 = vpack.c.b16 %v427, %v426
        %v482 = vpack.c.b16 %v429, %v428
        %v483 = vpack.c.b16 %v431, %v430
        %v484 = vpack.c.b16 %v433, %v432
        %v485 = vpack.c.b16 %v435, %v434
        %v486 = vpack.c.b16 %v437, %v436
        %v487 = vpack.c.b16 %v439, %v438
        %v488 = vpack.c.b16 %v441, %v440
        %v489 = vpack.c.b16 %v443, %v442
        %v490 = vpack.c.b16 %v445, %v444
        %v491 = vpack.c.b16 %v447, %v446
        %v492 = vpack.c.b16 %v449, %v448
        %v493 = vpack.c.b16 %v451, %v450
        %v494 = vpack.c.b16 %v453, %v452
        %v495 = vpack.c.b16 %v455, %v454
        %v496 = vpack.c.b16 %v457, %v456
        %v497 = vpack.c.b16 %v459, %v458
        %v498 = vpack.c.b16 %v461, %v460
        %v499 = vpack.c.b16 %v463, %v462
        %v500 = vpack.c.b16 %v465, %v464
        %v501 = vpack.c.b16 %v467, %v466
        %v502 = vpack.c.b16 %v469, %v468
        %v503 = vpack.c.b16 %v471, %v470
        %536 = vmatpush.bf16.msra.mxu0 %v479
        %537 = vmatpush.bf16.msra.mxu0 %v478
        %538 = vmatpush.bf16.msra.mxu0 %v477
        %539 = vmatpush.bf16.msra.mxu0 %v476
        %540 = vmatpush.bf16.msra.mxu0 %v475
        %541 = vmatpush.bf16.msra.mxu0 %v474
        %542 = vmatpush.bf16.msra.mxu0 %v473
        %543 = vmatpush.bf16.msra.mxu0 %v472
        %544 = vmatmul.bf16.gmra.mxu0 %v336
        %v545 = vpop.f32.mrf.mxu0
        %v546 = vadd.f32 0.0, %v545
        %v547 = vpop.f32.mrf.mxu0
        %548 = vdwg.mxu0
        %549 = vmatpush.bf16.msra.mxu0 %v487
        %550 = vmatpush.bf16.msra.mxu0 %v486
        %551 = vmatpush.bf16.msra.mxu0 %v485
        %552 = vmatpush.bf16.msra.mxu0 %v484
        %553 = vmatpush.bf16.msra.mxu0 %v483
        %554 = vmatpush.bf16.msra.mxu0 %v482
        %555 = vmatpush.bf16.msra.mxu0 %v481
        %556 = vmatpush.bf16.msra.mxu0 %v480
        %557 = vmatmul.bf16.gmra.mxu0 %v337
        %v558 = vpop.f32.mrf.mxu0
        %v559 = vadd.f32 %v546, %v558
        %v560 = vpop.f32.mrf.mxu0
        %561 = vdwg.mxu0
        %562 = vmatpush.bf16.msra.mxu0 %v495
        %563 = vmatpush.bf16.msra.mxu0 %v494
        %564 = vmatpush.bf16.msra.mxu0 %v493
        %565 = vmatpush.bf16.msra.mxu0 %v492
        %566 = vmatpush.bf16.msra.mxu0 %v491
        %567 = vmatpush.bf16.msra.mxu0 %v490
        %568 = vmatpush.bf16.msra.mxu0 %v489
        %569 = vmatpush.bf16.msra.mxu0 %v488
        %570 = vmatmul.bf16.gmra.mxu0 %v338
        %v571 = vpop.f32.mrf.mxu0
        %v572 = vadd.f32 %v559, %v571
        %v573 = vpop.f32.mrf.mxu0
        %574 = vdwg.mxu0
        %575 = vmatpush.bf16.msra.mxu0 %v503
        %576 = vmatpush.bf16.msra.mxu0 %v502
        %577 = vmatpush.bf16.msra.mxu0 %v501
        %578 = vmatpush.bf16.msra.mxu0 %v500
        %579 = vmatpush.bf16.msra.mxu0 %v499
        %580 = vmatpush.bf16.msra.mxu0 %v498
        %581 = vmatpush.bf16.msra.mxu0 %v497
        %582 = vmatpush.bf16.msra.mxu0 %v496
        %583 = vmatmul.bf16.gmra.mxu0 %v339
        %v584 = vpop.f32.mrf.mxu0
        %v585 = vadd.f32 %v572, %v584
        %v586 = vpop.f32.mrf.mxu0
        %587 = vdwg.mxu0
        %v588 = vadd.f32 %v265, %v585
        %589 = vst [vmem:[%s233] sm:$0xff] %v588
        %s590 = sand.u32 %s109, 1
        %s591 = scalar_lea.sflag [#allocation5], %s590
        %s592 = sand.u32 %s109, 1
        %s593 = smul.addr %s592, 8
        %s594 = scalar_lea.vmem [#allocation9], %s593
        // Predicated region
        $region49: #{tpu_custom_call.1} parent=31 // pred_check
          %p595 = pneg %p119
        $region50: #{tpu_custom_call.1} parent=31 // pred_check_branch
          %597 = sbr.rel (%p595) target = $region52
        $region51: #{tpu_custom_call.1} parent=31 // pred_region
          %599 = vsyncadd %s591, 0
          %s600 = smul.addr %s23, 8
          %s601 = scalar_lea.hbm %s3, %s600
          %s603 = sshll.u32 %s594, 4
          %s604 = int_to_ptr.vmem [resolvable:$true] %s603
          %s605 = sshll.u32 %s601, 4
          %s606 = int_to_ptr.hbm [resolvable:$true] %s605
          %608 = dma.vmem_to_hbm [thread:$0]  %s604, 128, %s606, %s591
        $region52: #{tpu_custom_call.1} parent=31 // pred_fallthru
          _
      $region32: #{tpu_custom_call.1} parent=5 // pred_fallthru
        _
      %p609 = scmp.le.s32.totalorder 2, %s14
      // Predicated region
      $region53: #{tpu_custom_call.1} parent=5 // pred_check
        %p610 = pneg %p609
      $region54: #{tpu_custom_call.1} parent=5 // pred_check_branch
        %612 = sbr.rel (%p610) target = $region56
      $region55: #{tpu_custom_call.1} parent=5 // pred_region
        %s613 = ssub.s32 %s14, 2
        // Predicated region
        $region57: #{tpu_custom_call.1} parent=55 // pred_check
          %p614 = pneg %p125
        $region58: #{tpu_custom_call.1} parent=55 // pred_check_branch
          %616 = sbr.rel (%p614) target = $region60
        $region59: #{tpu_custom_call.1} parent=55 // pred_region
          %s617 = sand.u32 %s110, 1
          %s618 = scalar_lea.sflag [#allocation5], %s617
          %s619 = sand.u32 %s110, 1
          %s620 = smul.addr %s619, 8
          %s621 = scalar_lea.vmem [#allocation9], %s620
          %623 = dma.done %s618, 128
        $region60: #{tpu_custom_call.1} parent=55 // pred_fallthru
          _
      $region56: #{tpu_custom_call.1} parent=5 // pred_fallthru
        _
    $region6: #{tpu_custom_call.1} parent=1 // loop_footer
      %s18 = sadd.s32 1, %s14
    $region7: #{tpu_custom_call.1} parent=1 // loop_footer_branch
      %13 = sbr.rel target = $region3
    $region8: #{tpu_custom_call.1} parent=1 // loop_exit
      _
    %624 = vsyncpa [#allocation4], 1
    %s625 = scalar_lea.sflag [#allocation4], 1
    %626 = vsyncpa %s625, 1
    %627 = vsyncpa [#allocation7], 1
    %628 = vsyncpa [#allocation5], 1
    %s629 = scalar_lea.sflag [#allocation5], 1
    %630 = vsyncpa %s629, 1

</llo_original>
